<compile_context>
chip_gen: v7x
topology: tpu7x:2x2x1
jax: 0.10.0
libtpu: 0.0.40
codegen_flags: <defaults>
</compile_context>

<pallas_src>
import jax
import jax.numpy as jnp
from jax import lax
from jax.experimental import pallas as pl
from jax.experimental.pallas import tpu as pltpu

LANE = 128


def _round_up(x, m):
    return (x + m - 1) // m * m


# ----------------------------------------------------------------------------
# Kernel
# ----------------------------------------------------------------------------
def _head_kernel(x_ref, w_ref, cos_ref, sin_ref, o_ref):
    bb, T, C = x_ref.shape
    seg = o_ref.shape[-1]           # lane-padded head width (multiple of 128)

    # Single fused projection: (bb*T, C) @ (C, 5*seg) on the MXU (bf16 in,
    # f32 accumulate).  T % 8 == 0 keeps the reshape a pure layout view.
    x2d = x_ref[...].reshape(bb * T, C)
    proj = jnp.dot(x2d, w_ref[...], preferred_element_type=jnp.float32)

    # Lane-aligned, zero-padded segments: [q*s | (q@S)*s | k | k@S | v]
    # (softmax scale s = 1/sqrt(D) already folded into the q columns).
    q = proj[:, 0 * seg:1 * seg].reshape(bb, T, seg)
    qS = proj[:, 1 * seg:2 * seg].reshape(bb, T, seg)
    k = proj[:, 2 * seg:3 * seg].reshape(bb, T, seg)
    kS = proj[:, 3 * seg:4 * seg].reshape(bb, T, seg)
    v = proj[:, 4 * seg:5 * seg].reshape(bb, T, seg)

    # RoPE (f32 VPU math): rotated = x*cos + (x@S)*sin, with the even/odd
    # pair-swap already folded into the weight columns.  Padded lanes stay 0.
    cos = cos_ref[...][None]        # (1, T, seg), broadcast over batch
    sin = sin_ref[...][None]
    q = (q * cos + qS * sin).astype(jnp.bfloat16)
    k = (k * cos + kS * sin).astype(jnp.bfloat16)

    # Scaled dot-product attention.  Contraction over the padded head dim is
    # exact (pad lanes are zero); no explicit transpose, batched over bb.
    att = lax.dot_general(
        q, k, (((2,), (2,)), ((0,), (0,))),
        preferred_element_type=jnp.float32)                  # (bb, T, T)

    # Causal mask from a single (T,T) comparison, broadcast over batch.
    row = lax.broadcasted_iota(jnp.int32, (T, T), 0)
    col = lax.broadcasted_iota(jnp.int32, (T, T), 1)
    att = jnp.where((col <= row)[None], att, -jnp.inf)

    # Numerically-stable softmax (f32); approx reciprocal uses the EUP slot.
    m = jnp.max(att, axis=-1, keepdims=True)
    e = jnp.exp(att - m)
    denom = jnp.sum(e, axis=-1, keepdims=True)
    p = (e * pl.reciprocal(denom, approx=True)).astype(jnp.bfloat16)

    out = lax.dot_general(
        p, v.astype(jnp.bfloat16), (((2,), (1,)), ((0,), (0,))),
        preferred_element_type=jnp.float32)                  # (bb, T, seg)

    # Lane-dense (128-wide) unmasked store; wrapper slices back to D.
    o_ref[...] = out.astype(o_ref.dtype)


# ----------------------------------------------------------------------------
# Host-side parameter folding
# ----------------------------------------------------------------------------
def precompute_rope_tables(head_size, block_size, theta=10000.0):
    """cos/sin tables.  *_rep are (block_size, head_size) with values repeated
    per even/odd pair (kernel layout); *_half are (block_size, head_size//2)
    for the complex-style reference (torch.polar / view_as_complex)."""
    half = head_size // 2
    freqs = 1.0 / theta ** (
        jnp.arange(0, head_size, 2)[:half].astype(jnp.float32) / head_size)
    t = jnp.arange(block_size, dtype=jnp.float32)
    angles = jnp.outer(t, freqs)                       # (block_size, half)
    cos_h, sin_h = jnp.cos(angles), jnp.sin(angles)
    cos_rep = jnp.repeat(cos_h, 2, axis=-1)            # (block_size, head_size)
    sin_rep = jnp.repeat(sin_h, 2, axis=-1)
    return cos_rep, sin_rep, cos_h, sin_h


def make_swap_matrix(head_size):
    """S with (x @ S)[2i] = -x[2i+1], (x @ S)[2i+1] = x[2i] (host-side only)."""
    S = jnp.zeros((head_size, head_size), jnp.float32)
    idx = jnp.arange(0, head_size, 2)
    S = S.at[idx + 1, idx].set(-1.0)
    S = S.at[idx, idx + 1].set(1.0)
    return S


def fuse_weights(wq, wk, wv):
    """Fused weight [Wq*s | (Wq@S)*s | Wk | Wk@S | Wv], each segment
    zero-padded to a multiple of 128 lanes; s = 1/sqrt(D) (softmax scale
    folded into the query columns).  Returns (w_fused, seg)."""
    C, D = wq.shape
    seg = _round_up(D, LANE)
    S = make_swap_matrix(D)
    scale = 1.0 / (float(D) ** 0.5)

    def pad(w):
        return jnp.pad(w, ((0, 0), (0, seg - D)))

    w_fused = jnp.concatenate(
        [pad(wq * scale), pad((wq @ S) * scale), pad(wk), pad(wk @ S), pad(wv)],
        axis=1)
    return w_fused, seg


def pad_rope_tables(cos_rep, sin_rep, seg):
    T, D = cos_rep.shape
    padding = ((0, 0), (0, seg - D))
    return jnp.pad(cos_rep, padding), jnp.pad(sin_rep, padding)


def _default_batch_block(B, T, C, *, itemsize=2, target_bytes=1 << 20,
                         min_steps=8):
    """Pick bb so the per-step x block is ~<=1 MiB and the grid has several
    steps (pipelining depth + megacore load balancing)."""
    cap = max(1, target_bytes // max(1, T * C * itemsize))
    bb = max(1, min(cap, B // min_steps if B >= min_steps else 1))
    while B % bb:                     # force a divisor of B (handles odd B)
        bb -= 1
    return bb


# ----------------------------------------------------------------------------
# Wrapper
# ----------------------------------------------------------------------------
def head_forward(x, w_fused, cos_pad, sin_pad, head_size, *,
                 batch_block=None, vmem_limit_bytes=32 * 1024 * 1024):
    B, T, C = x.shape
    seg5 = w_fused.shape[1]
    seg = seg5 // 5

    bb = _default_batch_block(B, T, C) if batch_block is None else batch_block
    while B % bb:                     # auto-adjust user value to a divisor
        bb -= 1

    # bf16 MXU operands, f32 accumulation inside the kernel.
    x_bf = x.astype(jnp.bfloat16)
    w_bf = w_fused.astype(jnp.bfloat16)

    out_pad = pl.pallas_call(
        _head_kernel,
        out_shape=jax.ShapeDtypeStruct((B, T, seg), jnp.float32),
        grid_spec=pltpu.PrefetchScalarGridSpec(
            num_scalar_prefetch=0,
            grid=(B // bb,),
            in_specs=[
                pl.BlockSpec((bb, T, C), lambda b: (b, 0, 0)),    # x (bf16)
                pl.BlockSpec((C, seg5), lambda b: (0, 0)),        # fused W (bf16)
                pl.BlockSpec((T, seg), lambda b: (0, 0)),         # cos (f32)
                pl.BlockSpec((T, seg), lambda b: (0, 0)),         # sin (f32)
            ],
            out_specs=pl.BlockSpec((bb, T, seg), lambda b: (b, 0, 0)),
        ),
        compiler_params=pltpu.CompilerParams(
            dimension_semantics=("parallel",),
            vmem_limit_bytes=vmem_limit_bytes),
    )(x_bf, w_bf, cos_pad, sin_pad)

    # Drop the lane padding outside the kernel (cheap XLA slice).
    return out_pad[..., :head_size]


# ----------------------------------------------------------------------------
# Pure-JAX reference (mirrors the PyTorch module, eval mode)
# ----------------------------------------------------------------------------
def reference_forward(x, wq, wk, wv, cos_half, sin_half):
    q = x @ wq
    k = x @ wk
    v = x @ wv

    def rope(z):
        B, T, D = z.shape
        zr = z.reshape(B, T, D // 2, 2)
        xr, xi = zr[..., 0], zr[..., 1]
        fr, fi = cos_half[None, :T], sin_half[None, :T]
        out = jnp.stack([xr * fr - xi * fi, xr * fi + xi * fr], axis=-1)
        return out.reshape(B, T, D)

    q = rope(q)
    k = rope(k)
    scale = 1.0 / (k.shape[-1] ** 0.5)
    att = jnp.einsum("btd,bsd->bts", q, k) * scale
    T = x.shape[1]
    mask = jnp.tril(jnp.ones((T, T), bool))
    att = jnp.where(mask[None], att, -jnp.inf)
    att = jax.nn.softmax(att, axis=-1)
    return jnp.einsum("bts,bsd->btd", att, v)


if __name__ == "__main__":
    # module hyperparameters
    n_embd = 32
    head_size = 16
    block_size = 8
    dropout = 0.0   # eval-mode identity

    # input: (B, T, C)
    B, T = 2, block_size
    key = jax.random.PRNGKey(0)
    kx, kq, kk, kv = jax.random.split(key, 4)
    x = jax.random.normal(kx, (B, T, n_embd), jnp.float32)

    # deterministic parameter init (PyTorch Linear weight is (D, C); store transposed)
    bound = 1.0 / (n_embd ** 0.5)
    wq = jax.random.uniform(kq, (n_embd, head_size), jnp.float32, -bound, bound)
    wk = jax.random.uniform(kk, (n_embd, head_size), jnp.float32, -bound, bound)
    wv = jax.random.uniform(kv, (n_embd, head_size), jnp.float32, -bound, bound)

    cos_rep, sin_rep, cos_h, sin_h = precompute_rope_tables(head_size, block_size)
    w_fused, seg = fuse_weights(wq, wk, wv)                 # (C, 5*seg), scale folded
    cos_pad, sin_pad = pad_rope_tables(cos_rep[:T], sin_rep[:T], seg)

    out = head_forward(x, w_fused, cos_pad, sin_pad, head_size)
    out = jax.block_until_ready(out)

    ref = reference_forward(x, wq, wk, wv, cos_h[:T], sin_h[:T])
    assert out.shape == (B, T, head_size)
    # tolerance accounts for bf16 MXU operands + approx-reciprocal softmax denom
    assert jnp.allclose(out, ref, atol=3e-2, rtol=3e-2), "mismatch vs reference"

    print("KERNEL_OK")
</pallas_src>

<mosaic_0001>
module attributes {stable_mosaic.version = 11 : i64} {
  func.func @_head_kernel(%arg0: i32, %arg1: memref<1x8x32xbf16, #tpu.memory_space<vmem>>, %arg2: memref<32x640xbf16, #tpu.memory_space<vmem>>, %arg3: memref<8x128xf32, #tpu.memory_space<vmem>>, %arg4: memref<8x128xf32, #tpu.memory_space<vmem>>, %arg5: memref<1x8x128xf32, #tpu.memory_space<vmem>>) attributes {dimension_semantics = [#tpu.dimension_semantics<parallel>], iteration_bounds = array<i64: 2>, scalar_prefetch = 0 : i64, scratch_operands = 0 : i64, tpu.core_type = #tpu.core_type<tc>, window_params = [{transform_indices = @transform_0, window_bounds = array<i64: 1, 8, 32>}, {pipeline_mode = #tpu.pipeline_mode<synchronous>, transform_indices = @transform_1, window_bounds = array<i64: 32, 640>}, {pipeline_mode = #tpu.pipeline_mode<synchronous>, transform_indices = @transform_2, window_bounds = array<i64: 8, 128>}, {pipeline_mode = #tpu.pipeline_mode<synchronous>, transform_indices = @transform_3, window_bounds = array<i64: 8, 128>}, {transform_indices = @transform_4, window_bounds = array<i64: 1, 8, 128>}]} {
    %c0 = arith.constant 0 : index
    %c0_0 = arith.constant 0 : index
    %c0_1 = arith.constant 0 : index
    %0 = vector.load %arg1[%c0, %c0_0, %c0_1] : memref<1x8x32xbf16, #tpu.memory_space<vmem>>, vector<1x8x32xbf16>
    %1 = vector.shape_cast %0 : vector<1x8x32xbf16> to vector<8x32xbf16>
    %c0_2 = arith.constant 0 : index
    %c0_3 = arith.constant 0 : index
    %2 = vector.load %arg2[%c0_2, %c0_3] : memref<32x640xbf16, #tpu.memory_space<vmem>>, vector<32x640xbf16>
    %cst = arith.constant dense<0.000000e+00> : vector<8x640xf32>
    %3 = tpu.matmul %1, %2, %cst {dimension_numbers = #tpu.dot_dimension_numbers<[1], [0], [0], [1], [0, 0, 1, 1], [], []>} : vector<8x32xbf16>, vector<32x640xbf16>, vector<8x640xf32> -> vector<8x640xf32>
    %4 = vector.extract_strided_slice %3 {offsets = [0, 0], sizes = [8, 128], strides = [1, 1]} : vector<8x640xf32> to vector<8x128xf32>
    %5 = vector.shape_cast %4 : vector<8x128xf32> to vector<1x8x128xf32>
    %6 = vector.extract_strided_slice %3 {offsets = [0, 128], sizes = [8, 128], strides = [1, 1]} : vector<8x640xf32> to vector<8x128xf32>
    %7 = vector.shape_cast %6 : vector<8x128xf32> to vector<1x8x128xf32>
    %8 = vector.extract_strided_slice %3 {offsets = [0, 256], sizes = [8, 128], strides = [1, 1]} : vector<8x640xf32> to vector<8x128xf32>
    %9 = vector.shape_cast %8 : vector<8x128xf32> to vector<1x8x128xf32>
    %10 = vector.extract_strided_slice %3 {offsets = [0, 384], sizes = [8, 128], strides = [1, 1]} : vector<8x640xf32> to vector<8x128xf32>
    %11 = vector.shape_cast %10 : vector<8x128xf32> to vector<1x8x128xf32>
    %12 = vector.extract_strided_slice %3 {offsets = [0, 512], sizes = [8, 128], strides = [1, 1]} : vector<8x640xf32> to vector<8x128xf32>
    %13 = vector.shape_cast %12 : vector<8x128xf32> to vector<1x8x128xf32>
    %c0_4 = arith.constant 0 : index
    %c0_5 = arith.constant 0 : index
    %14 = vector.load %arg3[%c0_4, %c0_5] : memref<8x128xf32, #tpu.memory_space<vmem>>, vector<8x128xf32>
    %15 = vector.shape_cast %14 : vector<8x128xf32> to vector<1x8x128xf32>
    %c0_6 = arith.constant 0 : index
    %c0_7 = arith.constant 0 : index
    %16 = vector.load %arg4[%c0_6, %c0_7] : memref<8x128xf32, #tpu.memory_space<vmem>>, vector<8x128xf32>
    %17 = vector.shape_cast %16 : vector<8x128xf32> to vector<1x8x128xf32>
    %18 = arith.mulf %5, %15 : vector<1x8x128xf32>
    %19 = arith.mulf %7, %17 : vector<1x8x128xf32>
    %20 = arith.addf %18, %19 : vector<1x8x128xf32>
    %21 = arith.truncf %20 : vector<1x8x128xf32> to vector<1x8x128xbf16>
    %22 = arith.mulf %9, %15 : vector<1x8x128xf32>
    %23 = arith.mulf %11, %17 : vector<1x8x128xf32>
    %24 = arith.addf %22, %23 : vector<1x8x128xf32>
    %25 = arith.truncf %24 : vector<1x8x128xf32> to vector<1x8x128xbf16>
    %cst_8 = arith.constant dense<0.000000e+00> : vector<1x8x8xf32>
    %26 = tpu.matmul %21, %25, %cst_8 {dimension_numbers = #tpu.dot_dimension_numbers<[2], [2], [1], [1], [0, 0, 0, 1, 1, 1], [0], [0]>} : vector<1x8x128xbf16>, vector<1x8x128xbf16>, vector<1x8x8xf32> -> vector<1x8x8xf32>
    %27 = tpu.iota {dimensions = array<i32: 0>} : vector<8x8xi32>
    %28 = tpu.iota {dimensions = array<i32: 1>} : vector<8x8xi32>
    %29 = arith.cmpi sle, %28, %27 : vector<8x8xi32>
    %30 = vector.shape_cast %29 : vector<8x8xi1> to vector<1x8x8xi1>
    %cst_9 = arith.constant 0xFF800000 : f32
    %31 = vector.broadcast %cst_9 : f32 to vector<1x8x8xf32>
    %32 = arith.select %30, %26, %31 : vector<1x8x8xi1>, vector<1x8x8xf32>
    %cst_10 = arith.constant dense<0xFF800000> : vector<1x8xf32>
    %33 = vector.multi_reduction <maximumf>, %32, %cst_10 [2] : vector<1x8x8xf32> to vector<1x8xf32>
    %34 = vector.shape_cast %33 : vector<1x8xf32> to vector<1x8x1xf32>
    %35 = vector.broadcast %34 : vector<1x8x1xf32> to vector<1x8x8xf32>
    %36 = arith.subf %32, %35 : vector<1x8x8xf32>
    %37 = math.exp %36 : vector<1x8x8xf32>
    %cst_11 = arith.constant dense<0.000000e+00> : vector<1x8xf32>
    %38 = vector.multi_reduction <add>, %37, %cst_11 [2] : vector<1x8x8xf32> to vector<1x8xf32>
    %39 = vector.shape_cast %38 : vector<1x8xf32> to vector<1x8x1xf32>
    %40 = tpu.reciprocal %39 {approx = true} : vector<1x8x1xf32> -> vector<1x8x1xf32>
    %41 = vector.broadcast %40 : vector<1x8x1xf32> to vector<1x8x8xf32>
    %42 = arith.mulf %37, %41 : vector<1x8x8xf32>
    %43 = arith.truncf %42 : vector<1x8x8xf32> to vector<1x8x8xbf16>
    %44 = arith.truncf %13 : vector<1x8x128xf32> to vector<1x8x128xbf16>
    %cst_12 = arith.constant dense<0.000000e+00> : vector<1x8x128xf32>
    %45 = tpu.matmul %43, %44, %cst_12 {dimension_numbers = #tpu.dot_dimension_numbers<[2], [1], [1], [2], [0, 0, 0, 1, 1, 2], [0], [0]>} : vector<1x8x8xbf16>, vector<1x8x128xbf16>, vector<1x8x128xf32> -> vector<1x8x128xf32>
    %c0_13 = arith.constant 0 : index
    %c0_14 = arith.constant 0 : index
    %c0_15 = arith.constant 0 : index
    %46 = vector.load %arg5[%c0_13, %c0_14, %c0_15] : memref<1x8x128xf32, #tpu.memory_space<vmem>>, vector<1x8x128xf32>
    tpu.vector_store %arg5[%c0_13, %c0_14, %c0_15], %45 {strides = array<i32>} : memref<1x8x128xf32, #tpu.memory_space<vmem>>, vector<1x8x128xf32>,
    return
  }
  func.func @transform_0(%arg0: i32) -> (i32, i32, i32) {
    %c0_i32 = arith.constant 0 : i32
    %c0_i32_0 = arith.constant 0 : i32
    %c0_i32_1 = arith.constant 0 : i32
    return %arg0, %c0_i32, %c0_i32_0 : i32, i32, i32
  }
  func.func @transform_1(%arg0: i32) -> (i32, i32) {
    %c0_i32 = arith.constant 0 : i32
    %c0_i32_0 = arith.constant 0 : i32
    %c0_i32_1 = arith.constant 0 : i32
    return %c0_i32, %c0_i32_0 : i32, i32
  }
  func.func @transform_2(%arg0: i32) -> (i32, i32) {
    %c0_i32 = arith.constant 0 : i32
    %c0_i32_0 = arith.constant 0 : i32
    %c0_i32_1 = arith.constant 0 : i32
    return %c0_i32, %c0_i32_0 : i32, i32
  }
  func.func @transform_3(%arg0: i32) -> (i32, i32) {
    %c0_i32 = arith.constant 0 : i32
    %c0_i32_0 = arith.constant 0 : i32
    %c0_i32_1 = arith.constant 0 : i32
    return %c0_i32, %c0_i32_0 : i32, i32
  }
  func.func @transform_4(%arg0: i32) -> (i32, i32, i32) {
    %c0_i32 = arith.constant 0 : i32
    %c0_i32_0 = arith.constant 0 : i32
    %c0_i32_1 = arith.constant 0 : i32
    return %arg0, %c0_i32, %c0_i32_0 : i32, i32, i32
  }
}

</mosaic_0001>

<llo_original>
// kernel: tpu_custom_call.1
$region0: #{tpu_custom_call.1}
  #allocation0 [shape = 'u32[]', space=smem, size = 0x4, offset = 0x4, fixed_abs, tag = 'smem constant byte address 0x4 - core index']
  #allocation1 [shape = 'u32[144,128]{1,0:T(1,128)}', space=vmem, size = 0x12000, scoped, tag = 'internal scratch']
  %s0 = inlined_call_operand.hbm [shape: bf16[2,8,32], index: 0, kind: input, shape index: {}]
  %s1 = inlined_call_operand.hbm [shape: bf16[32,640], index: 1, kind: input, shape index: {}]
  %s2 = inlined_call_operand.hbm [shape: f32[8,128], index: 2, kind: input, shape index: {}]
  %s3 = inlined_call_operand.vmem [shape: f32[8,128], index: 3, kind: input, shape index: {}]
  %s4 = inlined_call_operand.hbm [shape: f32[2,8,128], index: 4, kind: output, shape index: {}]
  %s5 = sld [smem:[#allocation0]]
  $region61: #{tpu_custom_call.1} parent=0
    _
  %s7 = ssub.s32 1, %s5
  %s8 = scalar_select 0, %s7, %s5
  $region1: #{tpu_custom_call.1} parent=0
    #allocation2 [shape = 'u8[4096]{0}', space=vmem, size = 0x1000, scoped, tag = 'input window, operand 0']
    #allocation3 [shape = 's32[2]{0}', space=sflag, size = 0x8, scoped, tag = 'scoped memory for tpu_custom_call.1']
    #allocation4 [shape = 's32[2]{0}', space=sflag, size = 0x8, scoped, tag = 'scoped memory for tpu_custom_call.1']
    #allocation5 [shape = 'u8[40960]{0}', space=vmem, size = 0xa000, scoped, tag = 'input window, operand 1, single buffered']
    #allocation6 [shape = 's32[1]{0}', space=sflag, size = 0x4, scoped, tag = 'scoped memory for tpu_custom_call.1']
    #allocation7 [shape = 'u8[4096]{0}', space=vmem, size = 0x1000, scoped, tag = 'input window, operand 2, single buffered']
    #allocation8 [shape = 'u8[8192]{0}', space=vmem, size = 0x2000, scoped, tag = 'output window, operand 0']
    %9 = vsyncpa [#allocation3], 0
    %s10 = scalar_lea.sflag [#allocation3], 1
    %11 = vsyncpa %s10, 0
    %12 = vsyncpa [#allocation6], 0
    %13 = vsyncpa [#allocation4], 0
    %s14 = scalar_lea.sflag [#allocation4], 1
    %15 = vsyncpa %s14, 0
    loop: start=0, step=1, limit=4
    $region2: #{tpu_custom_call.1} parent=1 // loop_pre_header
      _
    $region3: #{tpu_custom_call.1} parent=1 // loop_header
      %s17 = sphi 0, %s21
      %p18 = scmp.ge.s32.totalorder %s17, 4
      %s27 = sphi 0, %s29
      %s30 = sphi 0, %s27
      %s31 = sphi 0, %s30
      %s47 = sphi 0, %s31
      %s51 = sphi 0, %s51
      %s53 = sphi 0, %s51
      %s54 = sphi 0, %s53
      %s68 = sphi 0, %s54
      %s72 = sphi 0, %s72
      %s74 = sphi 0, %s72
      %s75 = sphi 0, %s74
      %s89 = sphi 0, %s75
      %s93 = sphi 0, %s93
      %s95 = sphi 0, %s93
      %s96 = sphi 0, %s95
      %s110 = sphi 0, %s96
      %s116 = sphi 0, %s118
      %s119 = sphi 0, %s116
      %s120 = sphi 0, %s119
      %s136 = sphi 0, %s120
    $region4: #{tpu_custom_call.1} parent=1 // loop_header_branch
      %20 = sbr.rel (%p18) target = $region8
    $region5: #{tpu_custom_call.1} parent=1 // loop_body
      %s22 = ssub.s32 %s17, 1
      %s23 = ssub.s32 %s17, 2
      %s24 = sadd.s32 %s17, 1
      %s25 = ssub.s32 %s17, %s24
      %p26 = scmp.eq.s32.totalorder %s25, 0
      %s28 = sadd.s32 %s27, 1
      %s29 = scalar_select %p26, %s27, %s28
      %p32 = pneg %p26
      %p33 = scmp.eq.s32.totalorder %s17, 1
      %p34 = por %p32, %p33
      %p35 = scmp.ne.s32.totalorder %s27, %s30
      %p36 = scmp.eq.s32.totalorder %s17, 0
      %p37 = por %p35, %p36
      %p38 = scmp.ne.s32.totalorder %s27, %s30
      %p39 = scmp.eq.s32.totalorder %s22, 1
      %p40 = por %p38, %p39
      %p41 = scmp.ne.s32.totalorder %s30, %s31
      %p42 = scmp.eq.s32.totalorder %s22, 0
      %p43 = por %p41, %p42
      %p44 = scmp.ne.s32.totalorder %s30, %s31
      %p45 = scmp.eq.s32.totalorder %s23, 1
      %p46 = por %p44, %p45
      %p48 = scmp.ne.s32.totalorder %s31, %s47
      %p49 = scmp.eq.s32.totalorder %s23, 0
      %p50 = por %p48, %p49
      %s52 = sadd.s32 %s51, 1
      %p55 = scmp.eq.s32.totalorder %s17, 1
      %p56 = scmp.ne.s32.totalorder %s51, %s53
      %p57 = scmp.eq.s32.totalorder %s17, 0
      %p58 = por %p56, %p57
      %p59 = scmp.ne.s32.totalorder %s51, %s53
      %p60 = scmp.eq.s32.totalorder %s22, 1
      %p61 = por %p59, %p60
      %p62 = scmp.ne.s32.totalorder %s53, %s54
      %p63 = scmp.eq.s32.totalorder %s22, 0
      %p64 = por %p62, %p63
      %p65 = scmp.ne.s32.totalorder %s53, %s54
      %p66 = scmp.eq.s32.totalorder %s23, 1
      %p67 = por %p65, %p66
      %p69 = scmp.ne.s32.totalorder %s54, %s68
      %p70 = scmp.eq.s32.totalorder %s23, 0
      %p71 = por %p69, %p70
      %s73 = sadd.s32 %s72, 1
      %p76 = scmp.eq.s32.totalorder %s17, 1
      %p77 = scmp.ne.s32.totalorder %s72, %s74
      %p78 = scmp.eq.s32.totalorder %s17, 0
      %p79 = por %p77, %p78
      %p80 = scmp.ne.s32.totalorder %s72, %s74
      %p81 = scmp.eq.s32.totalorder %s22, 1
      %p82 = por %p80, %p81
      %p83 = scmp.ne.s32.totalorder %s74, %s75
      %p84 = scmp.eq.s32.totalorder %s22, 0
      %p85 = por %p83, %p84
      %p86 = scmp.ne.s32.totalorder %s74, %s75
      %p87 = scmp.eq.s32.totalorder %s23, 1
      %p88 = por %p86, %p87
      %p90 = scmp.ne.s32.totalorder %s75, %s89
      %p91 = scmp.eq.s32.totalorder %s23, 0
      %p92 = por %p90, %p91
      %s94 = sadd.s32 %s93, 1
      %p97 = scmp.eq.s32.totalorder %s17, 1
      %p98 = scmp.ne.s32.totalorder %s93, %s95
      %p99 = scmp.eq.s32.totalorder %s17, 0
      %p100 = por %p98, %p99
      %p101 = scmp.ne.s32.totalorder %s93, %s95
      %p102 = scmp.eq.s32.totalorder %s22, 1
      %p103 = por %p101, %p102
      %p104 = scmp.ne.s32.totalorder %s95, %s96
      %p105 = scmp.eq.s32.totalorder %s22, 0
      %p106 = por %p104, %p105
      %p107 = scmp.ne.s32.totalorder %s95, %s96
      %p108 = scmp.eq.s32.totalorder %s23, 1
      %p109 = por %p107, %p108
      %p111 = scmp.ne.s32.totalorder %s96, %s110
      %p112 = scmp.eq.s32.totalorder %s23, 0
      %p113 = por %p111, %p112
      %s114 = ssub.s32 %s17, %s24
      %p115 = scmp.eq.s32.totalorder %s114, 0
      %s117 = sadd.s32 %s116, 1
      %s118 = scalar_select %p115, %s116, %s117
      %p121 = pneg %p115
      %p122 = scmp.eq.s32.totalorder %s17, 1
      %p123 = por %p121, %p122
      %p124 = scmp.ne.s32.totalorder %s116, %s119
      %p125 = scmp.eq.s32.totalorder %s17, 0
      %p126 = por %p124, %p125
      %p127 = scmp.ne.s32.totalorder %s116, %s119
      %p128 = scmp.eq.s32.totalorder %s22, 1
      %p129 = por %p127, %p128
      %p130 = scmp.ne.s32.totalorder %s119, %s120
      %p131 = scmp.eq.s32.totalorder %s22, 0
      %p132 = por %p130, %p131
      %p133 = scmp.ne.s32.totalorder %s119, %s120
      %p134 = scmp.eq.s32.totalorder %s23, 1
      %p135 = por %p133, %p134
      %p137 = scmp.ne.s32.totalorder %s120, %s136
      %p138 = scmp.eq.s32.totalorder %s23, 0
      %p139 = por %p137, %p138
      %p140 = scmp.le.s32.totalorder 1, %s17
      %p141 = scmp.lt.s32.totalorder %s17, 3
      %p142 = pnand %p140, %p141
      %p143 = pneg %p142
      // Predicated region
      $region9: #{tpu_custom_call.1} parent=5 // pred_check
        _
      $region10: #{tpu_custom_call.1} parent=5 // pred_check_branch
        %145 = sbr.rel (%p142) target = $region12
      $region11: #{tpu_custom_call.1} parent=5 // pred_region
        %s146 = ssub.s32 %s17, 1
        // Predicated region
        $region13: #{tpu_custom_call.1} parent=11 // pred_check
          %p147 = pneg %p64
        $region14: #{tpu_custom_call.1} parent=11 // pred_check_branch
          %149 = sbr.rel (%p147) target = $region16
        $region15: #{tpu_custom_call.1} parent=11 // pred_region
          %s151 = ssub.s32 1280, 1280
          %152 = vsyncadd [#allocation6], %s151
          %s153 = sshll.u32 [#allocation5], 4
          %s154 = int_to_ptr.vmem [resolvable:$true] %s153
          %159 = dma.hbm_to_vmem [thread:$0]  %s1, 1280, %s154, [#allocation6], 320, 320, 20
        $region16: #{tpu_custom_call.1} parent=11 // pred_fallthru
          _
        // Predicated region
        $region17: #{tpu_custom_call.1} parent=11 // pred_check
          %p160 = pneg %p85
        $region18: #{tpu_custom_call.1} parent=11 // pred_check_branch
          %162 = sbr.rel (%p160) target = $region20
        $region19: #{tpu_custom_call.1} parent=11 // pred_region
          %s164 = ssub.s32 128, 128
          %165 = vsyncadd [#allocation6], %s164
          %s167 = sshll.u32 [#allocation7], 4
          %s168 = int_to_ptr.vmem [resolvable:$true] %s167
          %170 = dma.hbm_to_vmem [thread:$0]  %s2, 128, %s168, [#allocation6]
        $region20: #{tpu_custom_call.1} parent=11 // pred_fallthru
          _
        // Predicated region
        $region21: #{tpu_custom_call.1} parent=11 // pred_check
          %p171 = pneg %p106
        $region22: #{tpu_custom_call.1} parent=11 // pred_check_branch
          %173 = sbr.rel (%p171) target = $region24
        $region23: #{tpu_custom_call.1} parent=11 // pred_region
          _
        $region24: #{tpu_custom_call.1} parent=11 // pred_fallthru
          _
      $region12: #{tpu_custom_call.1} parent=5 // pred_fallthru
        _
      %p174 = scmp.lt.s32.totalorder %s17, 2
      // Predicated region
      $region25: #{tpu_custom_call.1} parent=5 // pred_check
        %p175 = pneg %p174
      $region26: #{tpu_custom_call.1} parent=5 // pred_check_branch
        %177 = sbr.rel (%p175) target = $region28
      $region27: #{tpu_custom_call.1} parent=5 // pred_region
        // Predicated region
        $region29: #{tpu_custom_call.1} parent=27 // pred_check
          %p178 = pneg %p37
        $region30: #{tpu_custom_call.1} parent=27 // pred_check_branch
          %180 = sbr.rel (%p178) target = $region32
        $region31: #{tpu_custom_call.1} parent=27 // pred_region
          %s181 = sand.u32 %s27, 1
          %s182 = scalar_lea.sflag [#allocation3], %s181
          %s183 = sand.u32 %s27, 1
          %s184 = smul.addr %s183, 4
          %s185 = scalar_lea.vmem [#allocation2], %s184
          %s187 = ssub.s32 64, 64
          %188 = vsyncadd %s182, %s187
          %s189 = smul.addr %s17, 64
          %s190 = scalar_lea.hbm %s0, %s189
          %s192 = sshll.u32 %s185, 4
          %s193 = int_to_ptr.vmem [resolvable:$true] %s192
          %195 = dma.hbm_to_vmem [thread:$0]  %s190, 64, %s193, %s182
        $region32: #{tpu_custom_call.1} parent=27 // pred_fallthru
          _
      $region28: #{tpu_custom_call.1} parent=5 // pred_fallthru
        _
      %p196 = scmp.le.s32.totalorder 1, %s17
      %p197 = scmp.lt.s32.totalorder %s17, 3
      %p198 = pnand %p196, %p197
      %p199 = pneg %p198
      // Predicated region
      $region33: #{tpu_custom_call.1} parent=5 // pred_check
        _
      $region34: #{tpu_custom_call.1} parent=5 // pred_check_branch
        %201 = sbr.rel (%p198) target = $region36
      $region35: #{tpu_custom_call.1} parent=5 // pred_region
        %s202 = ssub.s32 %s17, 1
        %s203 = sand.u32 %s30, 1
        %s204 = scalar_lea.sflag [#allocation3], %s203
        %s205 = sand.u32 %s30, 1
        %s206 = smul.addr %s205, 4
        %s207 = scalar_lea.vmem [#allocation2], %s206
        // Predicated region
        $region37: #{tpu_custom_call.1} parent=35 // pred_check
          %p208 = pneg %p43
        $region38: #{tpu_custom_call.1} parent=35 // pred_check_branch
          %210 = sbr.rel (%p208) target = $region40
        $region39: #{tpu_custom_call.1} parent=35 // pred_region
          %211 = dma.done %s204, 64
        $region40: #{tpu_custom_call.1} parent=35 // pred_fallthru
          _
        // Predicated region
        $region41: #{tpu_custom_call.1} parent=35 // pred_check
          %p212 = pneg %p64
        $region42: #{tpu_custom_call.1} parent=35 // pred_check_branch
          %214 = sbr.rel (%p212) target = $region44
        $region43: #{tpu_custom_call.1} parent=35 // pred_region
          %215 = dma.done [#allocation6], 1280
        $region44: #{tpu_custom_call.1} parent=35 // pred_fallthru
          _
        // Predicated region
        $region45: #{tpu_custom_call.1} parent=35 // pred_check
          %p216 = pneg %p85
        $region46: #{tpu_custom_call.1} parent=35 // pred_check_branch
          %218 = sbr.rel (%p216) target = $region48
        $region47: #{tpu_custom_call.1} parent=35 // pred_region
          %219 = dma.done [#allocation6], 128
        $region48: #{tpu_custom_call.1} parent=35 // pred_fallthru
          _
        %s220 = sand.u32 %s30, 1
        %s221 = scalar_lea.sflag [#allocation3], %s220
        %s222 = sand.u32 %s30, 1
        %s223 = smul.addr %s222, 4
        %s224 = scalar_lea.vmem [#allocation2], %s223
        %p225 = pneg %p43
        %p226 = pneg %p40
        %p227 = pneg %p64
        %p228 = pneg %p61
        %p229 = pneg %p85
        %p230 = pneg %p82
        %p231 = pneg %p106
        %p232 = pneg %p103
        %p233 = pneg %p132
        %p234 = pneg %p129
        %s235 = sand.u32 %s119, 1
        %s236 = scalar_lea.sflag [#allocation4], %s235
        %s237 = sand.u32 %s119, 1
        %s238 = smul.addr %s237, 8
        %s239 = scalar_lea.vmem [#allocation8], %s238
        %v241 = vld [vmem:[%s207] sm:$0xf]
        %v242 = vld [vmem:[#allocation5] sm:$0xff]
        %v243 = vld [vmem:[#allocation5 + $0x8] sm:$0xff]
        %v244 = vld [vmem:[#allocation5 + $0x10] sm:$0xf]
        %v245 = vld [vmem:[#allocation5 + $0x14] sm:$0xff]
        %v246 = vld [vmem:[#allocation5 + $0x1c] sm:$0xff]
        %v247 = vld [vmem:[#allocation5 + $0x24] sm:$0xf]
        %v248 = vld [vmem:[#allocation5 + $0x28] sm:$0xff]
        %v249 = vld [vmem:[#allocation5 + $0x30] sm:$0xff]
        %v250 = vld [vmem:[#allocation5 + $0x38] sm:$0xf]
        %v251 = vld [vmem:[#allocation5 + $0x3c] sm:$0xff]
        %v252 = vld [vmem:[#allocation5 + $0x44] sm:$0xff]
        %v253 = vld [vmem:[#allocation5 + $0x4c] sm:$0xf]
        %v266 = vunpack.c.l.b16 %v242
        %v267 = vunpack.c.h.b16 %v242
        %v268 = vunpack.c.l.b16 %v243
        %v269 = vunpack.c.h.b16 %v243
        %v270 = vunpack.c.l.b16 %v244
        %v271 = vunpack.c.l.b16 %v245
        %v272 = vunpack.c.h.b16 %v245
        %v273 = vunpack.c.l.b16 %v246
        %v274 = vunpack.c.h.b16 %v246
        %v275 = vunpack.c.l.b16 %v247
        %v276 = vunpack.c.l.b16 %v248
        %v277 = vunpack.c.h.b16 %v248
        %v278 = vunpack.c.l.b16 %v249
        %v279 = vunpack.c.h.b16 %v249
        %v280 = vunpack.c.l.b16 %v250
        %v281 = vunpack.c.l.b16 %v251
        %v282 = vunpack.c.h.b16 %v251
        %v283 = vunpack.c.l.b16 %v252
        %v284 = vunpack.c.h.b16 %v252
        %v285 = vunpack.c.l.b16 %v253
        %v286 = vpack.c.b16 %v271, %v266
        %v287 = vpack.c.b16 %v272, %v267
        %v288 = vpack.c.b16 %v273, %v268
        %v289 = vpack.c.b16 %v274, %v269
        %v290 = vpack.c.b16 %v275, %v270
        %v291 = vpack.c.b16 %v281, %v276
        %v292 = vpack.c.b16 %v282, %v277
        %v293 = vpack.c.b16 %v283, %v278
        %v294 = vpack.c.b16 %v284, %v279
        %v295 = vpack.c.b16 %v285, %v280
        %vm306 = vcmask 261120
        %v308 = vsel %vm306, %v241, 0
        %310 = vmatprep.subr.bf16.mxu0 %v287
        %311 = vmatpush1.bf16.msra.mxu0 %v286
        %312 = vmatprep.subr.bf16.mxu0 %v292
        %313 = vmatpush1.bf16.msra.mxu0 %v291
        %314 = vmatprep.subr.bf16.mxu0 0
        %315 = vmatpush1.bf16.msra.mxu0 0
        %316 = vmatprep.subr.bf16.mxu0 0
        %317 = vmatpush1.bf16.msra.mxu0 0
        %318 = vmatprep.subr.bf16.mxu0 0
        %319 = vmatpush1.bf16.msra.mxu0 0
        %320 = vmatprep.subr.bf16.mxu0 0
        %321 = vmatpush1.bf16.msra.mxu0 0
        %322 = vmatprep.subr.bf16.mxu0 0
        %323 = vmatpush1.bf16.msra.mxu0 0
        %324 = vmatprep.subr.bf16.mxu0 0
        %325 = vmatpush1.bf16.msra.mxu0 0
        %326 = vmatprep.subr.bf16.mxu0 0
        %327 = vmatpush1.bf16.msra.mxu0 0
        %328 = vmatprep.subr.bf16.mxu0 0
        %329 = vmatpush1.bf16.msra.mxu0 0
        %330 = vmatprep.subr.bf16.mxu0 0
        %331 = vmatpush1.bf16.msra.mxu0 0
        %332 = vmatprep.subr.bf16.mxu0 0
        %333 = vmatpush1.bf16.msra.mxu0 0
        %334 = vmatprep.subr.bf16.mxu0 0
        %335 = vmatpush1.bf16.msra.mxu0 0
        %336 = vmatprep.subr.bf16.mxu0 0
        %337 = vmatpush1.bf16.msra.mxu0 0
        %338 = vmatprep.subr.bf16.mxu0 0
        %339 = vmatpush1.bf16.msra.mxu0 0
        %340 = vmatprep.subr.bf16.mxu0 0
        %341 = vmatpush1.bf16.msra.mxu0 0
        %342 = vmatprep.mubr.bf16.mxu0 0
        %343 = vmatmul.mubr.bf16.gmra.mrb[0].mxu0 %v308
        %v344 = vpop.f32.mrb[0].mxu0
        %v345 = vadd.f32 0.0, %v344
        %v346 = vpop.f32.mrb[0].mxu0
        %v347 = vadd.f32 0.0, %v346
        %v348 = vpop.f32.mrb[0].mxu0
        %v349 = vpop.f32.mrb[0].mxu0
        %350 = vdwg.mxu0
        %351 = vmatprep.subr.bf16.mxu0 %v289
        %352 = vmatpush1.bf16.msra.mxu0 %v288
        %353 = vmatprep.subr.bf16.mxu0 %v294
        %354 = vmatpush1.bf16.msra.mxu0 %v293
        %355 = vmatprep.subr.bf16.mxu0 0
        %356 = vmatpush1.bf16.msra.mxu0 0
        %357 = vmatprep.subr.bf16.mxu0 0
        %358 = vmatpush1.bf16.msra.mxu0 0
        %359 = vmatprep.subr.bf16.mxu0 0
        %360 = vmatpush1.bf16.msra.mxu0 0
        %361 = vmatprep.subr.bf16.mxu0 0
        %362 = vmatpush1.bf16.msra.mxu0 0
        %363 = vmatprep.subr.bf16.mxu0 0
        %364 = vmatpush1.bf16.msra.mxu0 0
        %365 = vmatprep.subr.bf16.mxu0 0
        %366 = vmatpush1.bf16.msra.mxu0 0
        %367 = vmatprep.subr.bf16.mxu0 0
        %368 = vmatpush1.bf16.msra.mxu0 0
        %369 = vmatprep.subr.bf16.mxu0 0
        %370 = vmatpush1.bf16.msra.mxu0 0
        %371 = vmatprep.subr.bf16.mxu0 0
        %372 = vmatpush1.bf16.msra.mxu0 0
        %373 = vmatprep.subr.bf16.mxu0 0
        %374 = vmatpush1.bf16.msra.mxu0 0
        %375 = vmatprep.subr.bf16.mxu0 0
        %376 = vmatpush1.bf16.msra.mxu0 0
        %377 = vmatprep.subr.bf16.mxu0 0
        %378 = vmatpush1.bf16.msra.mxu0 0
        %379 = vmatprep.subr.bf16.mxu0 0
        %380 = vmatpush1.bf16.msra.mxu0 0
        %381 = vmatprep.subr.bf16.mxu0 0
        %382 = vmatpush1.bf16.msra.mxu0 0
        %383 = vmatprep.mubr.bf16.mxu0 0
        %384 = vmatmul.mubr.bf16.gmra.mrb[0].mxu0 %v308
        %v385 = vpop.f32.mrb[0].mxu0
        %v386 = vadd.f32 0.0, %v385
        %v387 = vpop.f32.mrb[0].mxu0
        %v388 = vadd.f32 0.0, %v387
        %v389 = vpop.f32.mrb[0].mxu0
        %v390 = vpop.f32.mrb[0].mxu0
        %391 = vdwg.mxu0
        %392 = vmatprep.subr.bf16.mxu0 0
        %393 = vmatpush1.bf16.msra.mxu0 %v290
        %394 = vmatprep.subr.bf16.mxu0 0
        %395 = vmatpush1.bf16.msra.mxu0 %v295
        %396 = vmatprep.subr.bf16.mxu0 0
        %397 = vmatpush1.bf16.msra.mxu0 0
        %398 = vmatprep.subr.bf16.mxu0 0
        %399 = vmatpush1.bf16.msra.mxu0 0
        %400 = vmatprep.subr.bf16.mxu0 0
        %401 = vmatpush1.bf16.msra.mxu0 0
        %402 = vmatprep.subr.bf16.mxu0 0
        %403 = vmatpush1.bf16.msra.mxu0 0
        %404 = vmatprep.subr.bf16.mxu0 0
        %405 = vmatpush1.bf16.msra.mxu0 0
        %406 = vmatprep.subr.bf16.mxu0 0
        %407 = vmatpush1.bf16.msra.mxu0 0
        %408 = vmatprep.subr.bf16.mxu0 0
        %409 = vmatpush1.bf16.msra.mxu0 0
        %410 = vmatprep.subr.bf16.mxu0 0
        %411 = vmatpush1.bf16.msra.mxu0 0
        %412 = vmatprep.subr.bf16.mxu0 0
        %413 = vmatpush1.bf16.msra.mxu0 0
        %414 = vmatprep.subr.bf16.mxu0 0
        %415 = vmatpush1.bf16.msra.mxu0 0
        %416 = vmatprep.subr.bf16.mxu0 0
        %417 = vmatpush1.bf16.msra.mxu0 0
        %418 = vmatprep.subr.bf16.mxu0 0
        %419 = vmatpush1.bf16.msra.mxu0 0
        %420 = vmatprep.subr.bf16.mxu0 0
        %421 = vmatpush1.bf16.msra.mxu0 0
        %422 = vmatprep.subr.bf16.mxu0 0
        %423 = vmatpush1.bf16.msra.mxu0 0
        %424 = vmatprep.mubr.bf16.mxu0 0
        %425 = vmatmul.mubr.bf16.gmra.mrb[0].mxu0 %v308
        %v426 = vpop.f32.mrb[0].mxu0
        %v427 = vadd.f32 0.0, %v426
        %v428 = vpop.f32.mrb[0].mxu0
        %v429 = vpop.f32.mrb[0].mxu0
        %v430 = vpop.f32.mrb[0].mxu0
        %431 = vdwg.mxu0
        %v432 = vld [vmem:[#allocation7] sm:$0xff]
        %v433 = vld [vmem:[%s3] sm:$0xff]
        %v434 = vmul.f32 %v345, %v432
        %v435 = vmul.f32 %v347, %v433
        %v436 = vadd.f32 %v434, %v435
        %v437 = vpack.c.bf16 %v436, %v436
        %v438 = vmul.f32 %v386, %v432
        %v439 = vmul.f32 %v388, %v433
        %v440 = vadd.f32 %v438, %v439
        %v441 = vpack.c.bf16 %v440, %v440
        %442 = vmatprep.subr.bf16.mxu0 0
        %443 = vmatpush1.bf16.xpose.msra.mxu0 %v441
        %444 = vmatprep.subr.bf16.mxu0 0
        %445 = vmatpush1.bf16.xpose.msra.mxu0 0
        %446 = vmatprep.subr.bf16.mxu0 0
        %447 = vmatpush1.bf16.xpose.msra.mxu0 0
        %448 = vmatprep.subr.bf16.mxu0 0
        %449 = vmatpush1.bf16.xpose.msra.mxu0 0
        %450 = vmatprep.subr.bf16.mxu0 0
        %451 = vmatpush1.bf16.xpose.msra.mxu0 0
        %452 = vmatprep.subr.bf16.mxu0 0
        %453 = vmatpush1.bf16.xpose.msra.mxu0 0
        %454 = vmatprep.subr.bf16.mxu0 0
        %455 = vmatpush1.bf16.xpose.msra.mxu0 0
        %456 = vmatprep.subr.bf16.mxu0 0
        %457 = vmatpush1.bf16.xpose.msra.mxu0 0
        %458 = vmatprep.subr.bf16.mxu0 0
        %459 = vmatpush1.bf16.xpose.msra.mxu0 0
        %460 = vmatprep.subr.bf16.mxu0 0
        %461 = vmatpush1.bf16.xpose.msra.mxu0 0
        %462 = vmatprep.subr.bf16.mxu0 0
        %463 = vmatpush1.bf16.xpose.msra.mxu0 0
        %464 = vmatprep.subr.bf16.mxu0 0
        %465 = vmatpush1.bf16.xpose.msra.mxu0 0
        %466 = vmatprep.subr.bf16.mxu0 0
        %467 = vmatpush1.bf16.xpose.msra.mxu0 0
        %468 = vmatprep.subr.bf16.mxu0 0
        %469 = vmatpush1.bf16.xpose.msra.mxu0 0
        %470 = vmatprep.subr.bf16.mxu0 0
        %471 = vmatpush1.bf16.xpose.msra.mxu0 0
        %472 = vmatprep.subr.bf16.mxu0 0
        %473 = vmatpush1.bf16.xpose.msra.mxu0 0
        %474 = vmatprep.mubr.bf16.mxu0 0
        %475 = vmatmul.mubr.bf16.gmra.mrb[0].mxu0 %v437
        %v476 = vpop.f32.mrb[0].mxu0
        %v477 = vadd.f32 0.0, %v476
        %v478 = vpop.f32.mrb[0].mxu0
        %v479 = vpop.f32.mrb[0].mxu0
        %v480 = vpop.f32.mrb[0].mxu0
        %481 = vdwg.mxu0
        %v482 = vlaneseq
        %v483 = vshrl.u32 %v482, 7
        %v484 = vlaneseq
        %v485 = vand.u32 %v484, 127
        %vm486 = vcmp.le.s32.totalorder %v485, %v483
        %v487 = vsel %vm486, %v477, -inf
        %vm488 = vcmask 64512
        %v489 = vsel %vm488, %v487, -inf
        %490 = vmax.xlane.f32.xlu0 %v489
        %v491 = vpop.xlane.xlu0 %490
        %v492 = vsub.f32 %v487, %v491
        %v493 = vmul.f32 %v492, 1.442695
        %v494 = vpow.pop %v493
        %v495 = vsel %vm488, %v494, 0.0
        %496 = vadd.xlane.f32.xlu0 %v495
        %v497 = vpop.xlane.xlu0 %496
        %v498 = vrcp.pop %v497
        %v499 = vmul.f32 %v494, %v498
        %v500 = vpack.c.bf16 %v499, %v499
        %v501 = vpack.c.bf16 %v427, %v427
        %v503 = vsel %vm488, %v500, 0
        %vm505 = vcmask 1043456
        %v507 = vsel %vm505, %v501, 0
        %509 = vmatprep.subr.bf16.mxu0 0
        %510 = vmatpush1.bf16.msra.mxu0 %v507
        %511 = vmatprep.subr.bf16.mxu0 0
        %512 = vmatpush1.bf16.msra.mxu0 0
        %513 = vmatprep.subr.bf16.mxu0 0
        %514 = vmatpush1.bf16.msra.mxu0 0
        %515 = vmatprep.subr.bf16.mxu0 0
        %516 = vmatpush1.bf16.msra.mxu0 0
        %517 = vmatprep.subr.bf16.mxu0 0
        %518 = vmatpush1.bf16.msra.mxu0 0
        %519 = vmatprep.subr.bf16.mxu0 0
        %520 = vmatpush1.bf16.msra.mxu0 0
        %521 = vmatprep.subr.bf16.mxu0 0
        %522 = vmatpush1.bf16.msra.mxu0 0
        %523 = vmatprep.subr.bf16.mxu0 0
        %524 = vmatpush1.bf16.msra.mxu0 0
        %525 = vmatprep.subr.bf16.mxu0 0
        %526 = vmatpush1.bf16.msra.mxu0 0
        %527 = vmatprep.subr.bf16.mxu0 0
        %528 = vmatpush1.bf16.msra.mxu0 0
        %529 = vmatprep.subr.bf16.mxu0 0
        %530 = vmatpush1.bf16.msra.mxu0 0
        %531 = vmatprep.subr.bf16.mxu0 0
        %532 = vmatpush1.bf16.msra.mxu0 0
        %533 = vmatprep.subr.bf16.mxu0 0
        %534 = vmatpush1.bf16.msra.mxu0 0
        %535 = vmatprep.subr.bf16.mxu0 0
        %536 = vmatpush1.bf16.msra.mxu0 0
        %537 = vmatprep.subr.bf16.mxu0 0
        %538 = vmatpush1.bf16.msra.mxu0 0
        %539 = vmatprep.subr.bf16.mxu0 0
        %540 = vmatpush1.bf16.msra.mxu0 0
        %541 = vmatprep.mubr.bf16.mxu0 0
        %542 = vmatmul.mubr.bf16.gmra.mrb[0].mxu0 %v503
        %v543 = vpop.f32.mrb[0].mxu0
        %v544 = vadd.f32 0.0, %v543
        %v545 = vpop.f32.mrb[0].mxu0
        %v546 = vpop.f32.mrb[0].mxu0
        %v547 = vpop.f32.mrb[0].mxu0
        %548 = vdwg.mxu0
        %549 = vst [vmem:[%s239] sm:$0xff] %v544
        %s550 = sand.u32 %s119, 1
        %s551 = scalar_lea.sflag [#allocation4], %s550
        %s552 = sand.u32 %s119, 1
        %s553 = smul.addr %s552, 8
        %s554 = scalar_lea.vmem [#allocation8], %s553
        // Predicated region
        $region49: #{tpu_custom_call.1} parent=35 // pred_check
          %p555 = pneg %p129
        $region50: #{tpu_custom_call.1} parent=35 // pred_check_branch
          %557 = sbr.rel (%p555) target = $region52
        $region51: #{tpu_custom_call.1} parent=35 // pred_region
          %s559 = ssub.s32 128, 128
          %560 = vsyncadd %s551, %s559
          %s561 = smul.addr %s22, 128
          %s562 = scalar_lea.hbm %s4, %s561
          %s564 = sshll.u32 %s554, 4
          %s565 = int_to_ptr.vmem [resolvable:$true] %s564
          %567 = dma.vmem_to_hbm [thread:$0]  %s565, 128, %s562, %s551
        $region52: #{tpu_custom_call.1} parent=35 // pred_fallthru
          _
      $region36: #{tpu_custom_call.1} parent=5 // pred_fallthru
        _
      %p568 = scmp.le.s32.totalorder 2, %s17
      // Predicated region
      $region53: #{tpu_custom_call.1} parent=5 // pred_check
        %p569 = pneg %p568
      $region54: #{tpu_custom_call.1} parent=5 // pred_check_branch
        %571 = sbr.rel (%p569) target = $region56
      $region55: #{tpu_custom_call.1} parent=5 // pred_region
        %s572 = ssub.s32 %s17, 2
        // Predicated region
        $region57: #{tpu_custom_call.1} parent=55 // pred_check
          %p573 = pneg %p135
        $region58: #{tpu_custom_call.1} parent=55 // pred_check_branch
          %575 = sbr.rel (%p573) target = $region60
        $region59: #{tpu_custom_call.1} parent=55 // pred_region
          %s576 = sand.u32 %s120, 1
          %s577 = scalar_lea.sflag [#allocation4], %s576
          %s578 = sand.u32 %s120, 1
          %s579 = smul.addr %s578, 8
          %s580 = scalar_lea.vmem [#allocation8], %s579
          %581 = dma.done %s577, 128
        $region60: #{tpu_custom_call.1} parent=55 // pred_fallthru
          _
      $region56: #{tpu_custom_call.1} parent=5 // pred_fallthru
        _
    $region6: #{tpu_custom_call.1} parent=1 // loop_footer
      %s21 = sadd.s32 1, %s17
    $region7: #{tpu_custom_call.1} parent=1 // loop_footer_branch
      %16 = sbr.rel target = $region3
    $region8: #{tpu_custom_call.1} parent=1 // loop_exit
      _
    %582 = vsyncpa [#allocation3], 1
    %s583 = scalar_lea.sflag [#allocation3], 1
    %584 = vsyncpa %s583, 1
    %585 = vsyncpa [#allocation6], 1
    %586 = vsyncpa [#allocation4], 1
    %s587 = scalar_lea.sflag [#allocation4], 1
    %588 = vsyncpa %s587, 1

</llo_original>
